<compile_context>
chip_gen: v7x
topology: tpu7x:2x2x1
jax: 0.10.0
libtpu: 0.0.40
codegen_flags: <defaults>
</compile_context>

<pallas_src>
import math

import jax
import jax.numpy as jnp
from jax.experimental import pallas as pl
from jax.experimental.pallas import tpu as pltpu

_LANE = 128
_BLOCK_BYTES = 6 * 1024 * 1024            # per-block VMEM budget
_VMEM_LIMIT_BYTES = 40 * 1024 * 1024      # raised scoped VMEM (safe on all chips)
_SMALL_FASTPATH_BYTES = 1 * 1024 * 1024   # below this, plain XLA multiply wins
_PIPELINE_THRESHOLD_BYTES = 1 * 1024 * 1024
_MIN_GRID_STEPS = 8                       # keep DMA pipelined / both v7x TCs busy


def _sublane_pack(dtype) -> int:
    """Minimum sublane multiple for dense vreg packing of `dtype`."""
    itemsize = jnp.dtype(dtype).itemsize
    return max(8, 32 // itemsize)  # f32 -> 8, bf16 -> 16, int8/fp8 -> 32


def _choose_layout(n, shape, itemsize):
    """Return (rows, cols, needs_pad) for a lane-dense 2-D view of `n` elems."""
    # Preferred: widest lane count that divides n exactly (no pad, no ragged tail).
    for c in (4096, 2048, 1024, 512, 256, 128):
        if n % c == 0:
            return n // c, c, False
    # Ragged element count: collapse trailing original dims into the column dim.
    # Block's trailing dim will equal the full array dim -> legal without 128-div.
    cols = 1
    i = len(shape)
    while i > 0 and cols < _LANE:
        i -= 1
        cols *= int(shape[i])
    if cols * itemsize <= _BLOCK_BYTES:
        return n // cols, cols, False
    # Last resort (huge, awkward trailing dim): pad to a multiple of 512 lanes.
    cols = 512
    rows = -(-n // cols)
    return rows, cols, True


def _scale_kernel(s_ref, x_ref, o_ref):
    # s_ref: (1, 1) f32 scalar in SMEM; x_ref/o_ref: (block_rows, cols) VMEM tiles.
    x = x_ref[...]
    s = s_ref[0, 0]
    if x.dtype == jnp.float32:
        o_ref[...] = x * s
    else:
        # Multiply in the native dtype (bf16 VALU on v6e/v7x; lowered on v5e).
        o_ref[...] = (x * s.astype(x.dtype)).astype(o_ref.dtype)


def scale_forward(x: jax.Array, scale: jax.Array, *,
                  min_pallas_bytes: int = _SMALL_FASTPATH_BYTES) -> jax.Array:
    """Elementwise multiply `x` (any shape) by scalar parameter `scale`.

    Matches torch: input * nn.Parameter(FloatTensor([init_value])) (output in
    x.dtype). Set min_pallas_bytes=0 to force the Pallas path for testing.
    """
    orig_shape = x.shape
    dtype = x.dtype
    n = math.prod(orig_shape) if orig_shape else 1
    if n == 0:
        return x
    itemsize = jnp.dtype(dtype).itemsize
    total_bytes = n * itemsize

    # --- small-tensor fast path: XLA fused elementwise is already at roofline ---
    if total_bytes < min_pallas_bytes:
        s = scale.reshape(())
        if dtype == jnp.float32:
            return x * s.astype(jnp.float32)
        return (x * s.astype(dtype)).astype(dtype)

    # --- lane-dense 2-D view (no pad unless absolutely unavoidable) -------------
    rows, cols, needs_pad = _choose_layout(n, orig_shape, itemsize)
    if needs_pad:
        n_pad = rows * cols
        x2d = jnp.pad(x.reshape(-1), (0, n_pad - n)).reshape(rows, cols)
    else:
        x2d = x.reshape(rows, cols)

    # --- block sizing: big blocks, but keep >= _MIN_GRID_STEPS for pipelining ---
    sub_pack = _sublane_pack(dtype)
    block_rows = max(1, _BLOCK_BYTES // (cols * itemsize))
    if total_bytes > _PIPELINE_THRESHOLD_BYTES:
        block_rows = min(block_rows, -(-rows // _MIN_GRID_STEPS))
    block_rows = max(sub_pack, (block_rows // sub_pack) * sub_pack)
    if block_rows >= rows:
        block_rows = rows               # full-extent block (always legal)
        grid = (1,)
    else:
        grid = (-(-rows // block_rows),)  # trailing partial block is masked

    # Scalar parameter as a (1, 1) f32 array living in SMEM.
    s2d = scale.reshape(1, 1).astype(jnp.float32)

    out2d = pl.pallas_call(
        _scale_kernel,
        out_shape=jax.ShapeDtypeStruct((rows, cols), dtype),
        grid_spec=pltpu.PrefetchScalarGridSpec(
            num_scalar_prefetch=0,
            grid=grid,
            in_specs=[
                pl.BlockSpec(memory_space=pltpu.SMEM),               # scale scalar
                pl.BlockSpec((block_rows, cols), lambda i: (i, 0)),  # x tile
            ],
            out_specs=pl.BlockSpec((block_rows, cols), lambda i: (i, 0)),
        ),
        compiler_params=pltpu.CompilerParams(
            dimension_semantics=("parallel",),
            vmem_limit_bytes=_VMEM_LIMIT_BYTES,
        ),
    )(s2d, x2d)

    if needs_pad:
        return out2d.reshape(-1)[:n].reshape(orig_shape)
    return out2d.reshape(orig_shape)


class ScalePallas:
    """JAX/Pallas equivalent of the PyTorch `Scale` module."""

    def __init__(self, init_value: float = 1.0):
        # deterministic parameter init, identical to the PyTorch __init__
        self.scale = jnp.asarray([init_value], dtype=jnp.float32)

    def __call__(self, x: jax.Array, **kw) -> jax.Array:
        return scale_forward(x, self.scale, **kw)


if __name__ == "__main__":
    key = jax.random.PRNGKey(0)
    k1, k2, k3, k4 = jax.random.split(key, 4)

    module = ScalePallas(init_value=1.0)
    # Non-trivial scale value to actually exercise the multiply (exact in bf16).
    module.scale = jnp.asarray([0.5], dtype=jnp.float32)
    sval = 0.5

    # Case 1: small NCHW input -> default small-tensor XLA fast path.
    x1 = jax.random.normal(k1, (2, 4, 16, 16), dtype=jnp.float32)
    o1 = jax.block_until_ready(module(x1))
    assert o1.shape == x1.shape and o1.dtype == x1.dtype
    assert jnp.allclose(o1, x1 * sval, atol=1e-6, rtol=1e-6)

    # Case 2: same input, Pallas path forced (128-divisible, single block).
    o2 = jax.block_until_ready(module(x1, min_pallas_bytes=0))
    assert jnp.allclose(o2, x1 * sval, atol=1e-6, rtol=1e-6)

    # Case 3: SiamCAR-style 25x25 head map, Pallas forced (ragged, no pad).
    x3 = jax.random.normal(k2, (2, 4, 25, 25), dtype=jnp.float32)
    o3 = jax.block_until_ready(module(x3, min_pallas_bytes=0))
    assert o3.shape == x3.shape and o3.dtype == x3.dtype
    assert jnp.allclose(o3, x3 * sval, atol=1e-6, rtol=1e-6)

    # Case 4: 2 MiB tensor -> default Pallas path with a multi-step grid
    # (block_rows capped so the DMA pipeline stays full / both v7x TCs work).
    x4 = jax.random.normal(k3, (8, 16, 64, 64), dtype=jnp.float32)
    o4 = jax.block_until_ready(module(x4))
    assert o4.shape == x4.shape and o4.dtype == x4.dtype
    assert jnp.allclose(o4, x4 * sval, atol=1e-6, rtol=1e-6)

    # Case 5: bf16 input, Pallas forced -> native-dtype multiply path.
    x5 = jax.random.normal(k4, (2, 4, 25, 25), dtype=jnp.bfloat16)
    o5 = jax.block_until_ready(module(x5, min_pallas_bytes=0))
    assert o5.shape == x5.shape and o5.dtype == x5.dtype
    assert jnp.allclose(o5.astype(jnp.float32),
                        (x5 * jnp.bfloat16(sval)).astype(jnp.float32))

    print("KERNEL_OK")
</pallas_src>

<mosaic_0001>
module attributes {stable_mosaic.version = 11 : i64} {
  func.func @_scale_kernel(%arg0: i32, %arg1: memref<1x1xf32, #tpu.memory_space<smem>>, %arg2: memref<1x2048xf32, #tpu.memory_space<vmem>>, %arg3: memref<1x2048xf32, #tpu.memory_space<vmem>>) attributes {dimension_semantics = [#tpu.dimension_semantics<parallel>], iteration_bounds = array<i64: 1>, scalar_prefetch = 0 : i64, scratch_operands = 0 : i64, tpu.core_type = #tpu.core_type<tc>, window_params = [{transform_indices = @transform_0, window_bounds = array<i64: 1, 1>}, {transform_indices = @transform_1, window_bounds = array<i64: 1, 2048>}, {transform_indices = @transform_2, window_bounds = array<i64: 1, 2048>}]} {
    %c0 = arith.constant 0 : index
    %c0_0 = arith.constant 0 : index
    %0 = vector.load %arg2[%c0, %c0_0] : memref<1x2048xf32, #tpu.memory_space<vmem>>, vector<1x2048xf32>
    %c0_1 = arith.constant 0 : index
    %c0_2 = arith.constant 0 : index
    %1 = memref.load %arg1[%c0_1, %c0_2] : memref<1x1xf32, #tpu.memory_space<smem>>
    %2 = vector.broadcast %1 : f32 to vector<1x2048xf32>
    %3 = arith.mulf %0, %2 : vector<1x2048xf32>
    %c0_3 = arith.constant 0 : index
    %c0_4 = arith.constant 0 : index
    %4 = vector.load %arg3[%c0_3, %c0_4] : memref<1x2048xf32, #tpu.memory_space<vmem>>, vector<1x2048xf32>
    tpu.vector_store %arg3[%c0_3, %c0_4], %3 {strides = array<i32>} : memref<1x2048xf32, #tpu.memory_space<vmem>>, vector<1x2048xf32>,
    return
  }
  func.func @transform_0(%arg0: i32) -> (i32, i32) {
    %c0_i32 = arith.constant 0 : i32
    %c0_i32_0 = arith.constant 0 : i32
    %c0_i32_1 = arith.constant 0 : i32
    return %c0_i32, %c0_i32_0 : i32, i32
  }
  func.func @transform_1(%arg0: i32) -> (i32, i32) {
    %c0_i32 = arith.constant 0 : i32
    %c0_i32_0 = arith.constant 0 : i32
    return %arg0, %c0_i32 : i32, i32
  }
  func.func @transform_2(%arg0: i32) -> (i32, i32) {
    %c0_i32 = arith.constant 0 : i32
    %c0_i32_0 = arith.constant 0 : i32
    return %arg0, %c0_i32 : i32, i32
  }
}

</mosaic_0001>

<llo_original>
// kernel: tpu_custom_call.1
$region0: #{tpu_custom_call.1}
  #allocation0 [shape = 'u32[]', space=smem, size = 0x4, offset = 0x4, fixed_abs, tag = 'smem constant byte address 0x4 - core index']
  #allocation1 [shape = 'u32[144,128]{1,0:T(1,128)}', space=vmem, size = 0x12000, scoped, tag = 'internal scratch']
  #allocation2 [shape = 'f32[1,1]{1,0:T(1,128)S(6)}', space=smem, size = 0x200, scoped, tag = 'scoped memory for tpu_custom_call.1']
  %s0 = inlined_call_operand.<no memory space> [shape: f32[1,1], index: 0, kind: input, shape index: {}]
  %s1 = inlined_call_operand.hbm [shape: f32[1,2048], index: 1, kind: input, shape index: {}]
  %s2 = inlined_call_operand.hbm [shape: f32[1,2048], index: 2, kind: output, shape index: {}]
  %s3 = sld [smem:[#allocation0]]
  $region22: #{tpu_custom_call.1} parent=0
    _
  %s5 = ssub.s32 1, %s3
  %s6 = scalar_select 0, %s5, %s3
  %7 = sst [smem:[#allocation2]] %s0
  $region1: #{tpu_custom_call.1} parent=0
    #allocation3 [shape = 'u8[8192]{0}', space=vmem, size = 0x2000, scoped, tag = 'input window, operand 1, single buffered']
    #allocation4 [shape = 's32[1]{0}', space=sflag, size = 0x4, scoped, tag = 'scoped memory for tpu_custom_call.1']
    #allocation5 [shape = 's32[1]{0}', space=sflag, size = 0x4, scoped, tag = 'scoped memory for tpu_custom_call.1']
    #allocation6 [shape = 'u8[8192]{0}', space=vmem, size = 0x2000, scoped, tag = 'output window, operand 0, single buffered']
    %8 = vsyncpa [#allocation4], 0
    %9 = vsyncpa [#allocation5], 0
    // Predicated region
    $region2: #{tpu_custom_call.1} parent=1 // pred_check
      _
    $region3: #{tpu_custom_call.1} parent=1 // pred_check_branch
      %11 = sbr.rel (0) target = $region5
    $region4: #{tpu_custom_call.1} parent=1 // pred_region
      _
    $region5: #{tpu_custom_call.1} parent=1 // pred_fallthru
      _
    // Predicated region
    $region6: #{tpu_custom_call.1} parent=1 // pred_check
      _
    $region7: #{tpu_custom_call.1} parent=1 // pred_check_branch
      %13 = sbr.rel (0) target = $region9
    $region8: #{tpu_custom_call.1} parent=1 // pred_region
      %s15 = ssub.s32 256, 256
      %16 = vsyncadd [#allocation4], %s15
      %s18 = sshll.u32 [#allocation3], 4
      %s19 = int_to_ptr.vmem [resolvable:$true] %s18
      %21 = dma.hbm_to_vmem [thread:$0]  %s1, 256, %s19, [#allocation4]
    $region9: #{tpu_custom_call.1} parent=1 // pred_fallthru
      _
    // Predicated region
    $region10: #{tpu_custom_call.1} parent=1 // pred_check
      _
    $region11: #{tpu_custom_call.1} parent=1 // pred_check_branch
      %23 = sbr.rel (0) target = $region13
    $region12: #{tpu_custom_call.1} parent=1 // pred_region
      %24 = dma.done [#allocation4], 256
    $region13: #{tpu_custom_call.1} parent=1 // pred_fallthru
      _
    %v25 = vld [vmem:[#allocation3] sm:$0xff]
    %v26 = vld [vmem:[#allocation3 + $0x8] sm:$0xff]
    %s27 = sld [smem:[#allocation2]]
    %v28 = vstv %s27
    %v29 = vmul.f32 %v25, %v28
    %v30 = vmul.f32 %v26, %v28
    %31 = vst [vmem:[#allocation6] sm:$0xff] %v29
    %32 = vst [vmem:[#allocation6 + $0x8] sm:$0xff] %v30
    // Predicated region
    $region14: #{tpu_custom_call.1} parent=1 // pred_check
      _
    $region15: #{tpu_custom_call.1} parent=1 // pred_check_branch
      %34 = sbr.rel (0) target = $region17
    $region16: #{tpu_custom_call.1} parent=1 // pred_region
      %s36 = ssub.s32 256, 256
      %37 = vsyncadd [#allocation5], %s36
      %s39 = sshll.u32 [#allocation6], 4
      %s40 = int_to_ptr.vmem [resolvable:$true] %s39
      %42 = dma.vmem_to_hbm [thread:$0]  %s40, 256, %s2, [#allocation5]
    $region17: #{tpu_custom_call.1} parent=1 // pred_fallthru
      _
    // Predicated region
    $region18: #{tpu_custom_call.1} parent=1 // pred_check
      _
    $region19: #{tpu_custom_call.1} parent=1 // pred_check_branch
      %44 = sbr.rel (0) target = $region21
    $region20: #{tpu_custom_call.1} parent=1 // pred_region
      %45 = dma.done [#allocation5], 256
    $region21: #{tpu_custom_call.1} parent=1 // pred_fallthru
      _
    %46 = vsyncpa [#allocation4], 1
    %47 = vsyncpa [#allocation5], 1

</llo_original>
